<compile_context>
chip_gen: v5e
topology: v5e:2x2
jax: 0.10.0
libtpu: 0.0.40
codegen_flags: <defaults>
</compile_context>

<pallas_src>
import jax
import jax.numpy as jnp
from jax import lax
from jax.experimental import pallas as pl
from jax.experimental.pallas import tpu as pltpu

LANE = 128  # TPU vreg lane width


def _round_up(n, m):
    return ((n + m - 1) // m) * m


def _cdiv(a, b):
    return -(-a // b)


def make_mlp_kernel(num_hidden):
    """Build a fused MLP kernel for `num_hidden` (Linear+ReLU) layers followed
    by a Linear(., 1) + Sigmoid head.

    Hidden layers run with batch on sublanes and hidden widths zero-padded to
    128 lanes (single resident MXU weight block per layer, streamed rows).
    The head is computed transposed (w_last stored as [8, 128]; contraction
    over the lane/feature axis of both operands) so the result lands as
    [8, tile_b]; row 0 is the real logit row -> bias + sigmoid on (1, tile_b)
    only -> lane-dense (1, tile_b) store.
    """

    def kernel(*refs):
        x_ref = refs[0]
        o_ref = refs[-1]
        param_refs = refs[1:-1]

        h = x_ref[...].astype(jnp.bfloat16)          # in-kernel cast (no wrapper pass)
        for l in range(num_hidden):
            w_ref = param_refs[2 * l]
            b_ref = param_refs[2 * l + 1]
            a = jnp.dot(h, w_ref[...],
                        preferred_element_type=jnp.float32) + b_ref[...]
            a = jnp.maximum(a, 0.0)                  # ReLU (Dropout(p=0) == identity)
            h = a.astype(jnp.bfloat16)

        w_t_ref = param_refs[-2]                     # [8, 128] bf16, row 0 = W4[:, 0]
        b_last_ref = param_refs[-1]                  # (1, 1) f32 scalar in SMEM
        # (h @ W4)^T computed directly: contract lane axes of both operands.
        z = lax.dot_general(w_t_ref[...], h,
                            dimension_numbers=(((1,), (1,)), ((), ())),
                            preferred_element_type=jnp.float32)   # [8, tile_b]
        logit = z[0:1, :] + b_last_ref[0, 0]         # (1, tile_b)
        o_ref[...] = jax.nn.sigmoid(logit).astype(o_ref.dtype)

    return kernel


def pad_and_cast_params(params):
    """One-time param prep.

    Hidden Linears: zero-pad output width to 128 lanes, weights -> bf16,
    biases stay f32 as (1, 128) rows.
    Final Linear (out_dim == 1): stored TRANSPOSED as an [8, prev_pad] bf16
    block (row 0 = real weights, rows 1..7 zero) plus a (1, 1) f32 SMEM bias,
    so the kernel can emit a lane-dense (1, tile_b) output.
    Zero-padding is exact: padded hidden units stay 0 through ReLU and padded
    weight lanes multiply those zeros.
    """
    *hidden, (w_last, b_last) = params
    assert w_last.shape[1] == 1, "Sigmoid head: output_size must be 1"
    flat = []
    prev = params[0][0].shape[0]                  # input feature dim (unpadded)
    for (w, b) in hidden:
        in_dim, out_dim = w.shape
        out_pad = _round_up(out_dim, LANE)
        w_p = jnp.zeros((prev, out_pad), jnp.float32).at[:in_dim, :out_dim].set(w)
        b_p = jnp.zeros((1, out_pad), jnp.float32).at[:, :out_dim].set(
            jnp.reshape(jnp.asarray(b, jnp.float32), (1, -1)))
        flat += [w_p.astype(jnp.bfloat16), b_p]
        prev = out_pad
    in_dim = w_last.shape[0]
    w_t = jnp.zeros((8, prev), jnp.float32).at[0, :in_dim].set(
        jnp.asarray(w_last, jnp.float32)[:, 0])
    b_s = jnp.reshape(jnp.asarray(b_last, jnp.float32), (1, 1))
    flat += [w_t.astype(jnp.bfloat16), b_s]
    return tuple(flat)


def _choose_tile(batch, tile_b_max):
    """Pick (tile_b, grid): big tiles, lane-aligned, grid even when possible
    so v7x's two TensorCores get balanced work on the 'parallel' axis."""
    tile_b_max = max(LANE, (tile_b_max // LANE) * LANE)
    if batch <= 2 * LANE:
        return batch, 1                        # single full-array block (always legal)
    n = _cdiv(batch, tile_b_max)
    if n == 1:
        n = 2                                  # split so both v7x TCs get a tile
    if n % 2:
        n += 1                                 # even grid -> balanced megacore split
    tile_b = _round_up(_cdiv(batch, n), LANE)
    grid = _cdiv(batch, tile_b)
    return tile_b, grid


def mlp_forward(x, padded_params, *, tile_b_max=4096):
    """x: [B, F] f32 (streamed from HBM as-is). Returns [B, 1] f32 probabilities."""
    batch, feat = x.shape
    n_hidden = (len(padded_params) - 2) // 2
    tile_b, grid = _choose_tile(batch, tile_b_max)

    x_spec = pl.BlockSpec((tile_b, feat), lambda i: (i, 0))
    # Batch on lanes in the output: (1, tile_b) blocks of a (1, B) array.
    out_spec = pl.BlockSpec((1, tile_b), lambda i: (0, i))
    # Constant index_map: tiny weights/biases are DMA'd once, stay VMEM-resident.
    param_specs = [pl.BlockSpec(p.shape, lambda i: (0, 0))
                   for p in padded_params[:-1]]
    # Scalar head bias lives in SMEM.
    param_specs.append(pl.BlockSpec(memory_space=pltpu.MemorySpace.SMEM))

    y_row = pl.pallas_call(
        make_mlp_kernel(n_hidden),
        out_shape=jax.ShapeDtypeStruct((1, batch), jnp.float32),
        grid_spec=pltpu.PrefetchScalarGridSpec(
            num_scalar_prefetch=0,
            grid=(grid,),
            in_specs=[x_spec] + param_specs,
            out_specs=out_spec,
        ),
        compiler_params=pltpu.CompilerParams(
            dimension_semantics=("parallel",),      # megacore sharding on v7x
            vmem_limit_bytes=40 * 1024 * 1024,      # safe on v7x's 64 MiB VMEM
        ),
    )(x, *padded_params)

    # (1, B) -> (B, 1): row-major-compatible reshape, no data movement.
    return y_row.reshape(batch, 1)


def init_linear_params(key, in_dim, out_dim):
    """Deterministic init mimicking PyTorch nn.Linear default (U[-k, k], k=1/sqrt(in))."""
    kw, kb = jax.random.split(key)
    bound = 1.0 / jnp.sqrt(jnp.float32(in_dim))
    w = jax.random.uniform(kw, (in_dim, out_dim), jnp.float32, -bound, bound)
    b = jax.random.uniform(kb, (1, out_dim), jnp.float32, -bound, bound)
    return w, b


def mlp_reference(x, params):
    """Plain-JAX f32 reference of the same forward pass."""
    h = x
    n = len(params)
    for i, (w, b) in enumerate(params):
        h = h @ w + b
        if i < n - 1:
            h = jnp.maximum(h, 0.0)
        else:
            h = jax.nn.sigmoid(h)
    return h


if __name__ == "__main__":
    # Module hyperparameters implied by __init__:
    input_size = 16
    list_hidden_layer = [32, 32, 16]
    output_size = 1          # -> Sigmoid final activation

    key = jax.random.PRNGKey(0)
    kx, kx2, k1, k2, k3, k4 = jax.random.split(key, 6)
    dims = [input_size] + list_hidden_layer + [output_size]
    keys = [k1, k2, k3, k4]
    params = [init_linear_params(keys[i], dims[i], dims[i + 1])
              for i in range(len(dims) - 1)]
    padded_params = pad_and_cast_params(params)     # one-time param prep

    # Small batch consistent with the module's toy usage (single full block).
    batch = 8
    x = jax.random.normal(kx, (batch, input_size), jnp.float32)
    y = jax.block_until_ready(mlp_forward(x, padded_params))
    y_ref = mlp_reference(x, params)
    assert y.shape == (batch, output_size)
    # bf16 inputs/weights vs f32 reference -> loose tolerance.
    assert jnp.allclose(y, y_ref, atol=2e-2, rtol=0.0), \
        float(jnp.max(jnp.abs(y - y_ref)))

    # Larger ragged batch: grid=2, VMEM-resident weights, masked edge block,
    # lane-dense (1, tile_b) output stores.
    big_batch = 1000         # not a multiple of the chosen tile
    xb = jax.random.normal(kx2, (big_batch, input_size), jnp.float32)
    yb = jax.block_until_ready(mlp_forward(xb, padded_params))
    yb_ref = mlp_reference(xb, params)
    assert yb.shape == (big_batch, output_size)
    assert jnp.allclose(yb, yb_ref, atol=2e-2, rtol=0.0), \
        float(jnp.max(jnp.abs(yb - yb_ref)))

    # TODO(synk): training-mode Dropout (p>0), BatchNorm1d (batch_norm=True)
    # and the Softmax head (output_size>1) are not modeled; with the defaults
    # (drop_rate=0, batch_norm=False, output_size=1) they are identity /
    # unused in this forward pass.
    print("KERNEL_OK")
</pallas_src>

<mosaic_0001>
module attributes {stable_mosaic.version = 11 : i64} {
  func.func @kernel(%arg0: i32, %arg1: memref<8x16xf32, #tpu.memory_space<vmem>>, %arg2: memref<16x128xbf16, #tpu.memory_space<vmem>>, %arg3: memref<1x128xf32, #tpu.memory_space<vmem>>, %arg4: memref<128x128xbf16, #tpu.memory_space<vmem>>, %arg5: memref<1x128xf32, #tpu.memory_space<vmem>>, %arg6: memref<128x128xbf16, #tpu.memory_space<vmem>>, %arg7: memref<1x128xf32, #tpu.memory_space<vmem>>, %arg8: memref<8x128xbf16, #tpu.memory_space<vmem>>, %arg9: memref<1x1xf32, #tpu.memory_space<smem>>, %arg10: memref<1x8xf32, #tpu.memory_space<vmem>>) attributes {dimension_semantics = [#tpu.dimension_semantics<parallel>], iteration_bounds = array<i64: 1>, scalar_prefetch = 0 : i64, scratch_operands = 0 : i64, tpu.core_type = #tpu.core_type<tc>, window_params = [{transform_indices = @transform_0, window_bounds = array<i64: 8, 16>}, {pipeline_mode = #tpu.pipeline_mode<synchronous>, transform_indices = @transform_1, window_bounds = array<i64: 16, 128>}, {pipeline_mode = #tpu.pipeline_mode<synchronous>, transform_indices = @transform_2, window_bounds = array<i64: 1, 128>}, {pipeline_mode = #tpu.pipeline_mode<synchronous>, transform_indices = @transform_3, window_bounds = array<i64: 128, 128>}, {pipeline_mode = #tpu.pipeline_mode<synchronous>, transform_indices = @transform_4, window_bounds = array<i64: 1, 128>}, {pipeline_mode = #tpu.pipeline_mode<synchronous>, transform_indices = @transform_5, window_bounds = array<i64: 128, 128>}, {pipeline_mode = #tpu.pipeline_mode<synchronous>, transform_indices = @transform_6, window_bounds = array<i64: 1, 128>}, {pipeline_mode = #tpu.pipeline_mode<synchronous>, transform_indices = @transform_7, window_bounds = array<i64: 8, 128>}, {transform_indices = @transform_8, window_bounds = array<i64: 1, 1>}, {transform_indices = @transform_9, window_bounds = array<i64: 1, 8>}]} {
    %c0 = arith.constant 0 : index
    %c0_0 = arith.constant 0 : index
    %0 = vector.load %arg1[%c0, %c0_0] : memref<8x16xf32, #tpu.memory_space<vmem>>, vector<8x16xf32>
    %1 = arith.truncf %0 : vector<8x16xf32> to vector<8x16xbf16>
    %c0_1 = arith.constant 0 : index
    %c0_2 = arith.constant 0 : index
    %2 = vector.load %arg2[%c0_1, %c0_2] : memref<16x128xbf16, #tpu.memory_space<vmem>>, vector<16x128xbf16>
    %cst = arith.constant dense<0.000000e+00> : vector<8x128xf32>
    %3 = tpu.matmul %1, %2, %cst {dimension_numbers = #tpu.dot_dimension_numbers<[1], [0], [0], [1], [0, 0, 1, 1], [], []>} : vector<8x16xbf16>, vector<16x128xbf16>, vector<8x128xf32> -> vector<8x128xf32>
    %c0_3 = arith.constant 0 : index
    %c0_4 = arith.constant 0 : index
    %4 = vector.load %arg3[%c0_3, %c0_4] : memref<1x128xf32, #tpu.memory_space<vmem>>, vector<1x128xf32>
    %5 = vector.broadcast %4 : vector<1x128xf32> to vector<8x128xf32>
    %6 = arith.addf %3, %5 : vector<8x128xf32>
    %cst_5 = arith.constant 0.000000e+00 : f32
    %7 = vector.broadcast %cst_5 : f32 to vector<8x128xf32>
    %8 = arith.maximumf %6, %7 : vector<8x128xf32>
    %9 = arith.truncf %8 : vector<8x128xf32> to vector<8x128xbf16>
    %c0_6 = arith.constant 0 : index
    %c0_7 = arith.constant 0 : index
    %10 = vector.load %arg4[%c0_6, %c0_7] : memref<128x128xbf16, #tpu.memory_space<vmem>>, vector<128x128xbf16>
    %cst_8 = arith.constant dense<0.000000e+00> : vector<8x128xf32>
    %11 = tpu.matmul %9, %10, %cst_8 {dimension_numbers = #tpu.dot_dimension_numbers<[1], [0], [0], [1], [0, 0, 1, 1], [], []>} : vector<8x128xbf16>, vector<128x128xbf16>, vector<8x128xf32> -> vector<8x128xf32>
    %c0_9 = arith.constant 0 : index
    %c0_10 = arith.constant 0 : index
    %12 = vector.load %arg5[%c0_9, %c0_10] : memref<1x128xf32, #tpu.memory_space<vmem>>, vector<1x128xf32>
    %13 = vector.broadcast %12 : vector<1x128xf32> to vector<8x128xf32>
    %14 = arith.addf %11, %13 : vector<8x128xf32>
    %cst_11 = arith.constant 0.000000e+00 : f32
    %15 = vector.broadcast %cst_11 : f32 to vector<8x128xf32>
    %16 = arith.maximumf %14, %15 : vector<8x128xf32>
    %17 = arith.truncf %16 : vector<8x128xf32> to vector<8x128xbf16>
    %c0_12 = arith.constant 0 : index
    %c0_13 = arith.constant 0 : index
    %18 = vector.load %arg6[%c0_12, %c0_13] : memref<128x128xbf16, #tpu.memory_space<vmem>>, vector<128x128xbf16>
    %cst_14 = arith.constant dense<0.000000e+00> : vector<8x128xf32>
    %19 = tpu.matmul %17, %18, %cst_14 {dimension_numbers = #tpu.dot_dimension_numbers<[1], [0], [0], [1], [0, 0, 1, 1], [], []>} : vector<8x128xbf16>, vector<128x128xbf16>, vector<8x128xf32> -> vector<8x128xf32>
    %c0_15 = arith.constant 0 : index
    %c0_16 = arith.constant 0 : index
    %20 = vector.load %arg7[%c0_15, %c0_16] : memref<1x128xf32, #tpu.memory_space<vmem>>, vector<1x128xf32>
    %21 = vector.broadcast %20 : vector<1x128xf32> to vector<8x128xf32>
    %22 = arith.addf %19, %21 : vector<8x128xf32>
    %cst_17 = arith.constant 0.000000e+00 : f32
    %23 = vector.broadcast %cst_17 : f32 to vector<8x128xf32>
    %24 = arith.maximumf %22, %23 : vector<8x128xf32>
    %25 = arith.truncf %24 : vector<8x128xf32> to vector<8x128xbf16>
    %c0_18 = arith.constant 0 : index
    %c0_19 = arith.constant 0 : index
    %26 = vector.load %arg8[%c0_18, %c0_19] : memref<8x128xbf16, #tpu.memory_space<vmem>>, vector<8x128xbf16>
    %cst_20 = arith.constant dense<0.000000e+00> : vector<8x8xf32>
    %27 = tpu.matmul %26, %25, %cst_20 {dimension_numbers = #tpu.dot_dimension_numbers<[1], [1], [0], [0], [0, 0, 1, 0], [], []>} : vector<8x128xbf16>, vector<8x128xbf16>, vector<8x8xf32> -> vector<8x8xf32>
    %28 = vector.extract_strided_slice %27 {offsets = [0, 0], sizes = [1, 8], strides = [1, 1]} : vector<8x8xf32> to vector<1x8xf32>
    %c0_21 = arith.constant 0 : index
    %c0_22 = arith.constant 0 : index
    %29 = memref.load %arg9[%c0_21, %c0_22] : memref<1x1xf32, #tpu.memory_space<smem>>
    %30 = vector.broadcast %29 : f32 to vector<1x8xf32>
    %31 = arith.addf %28, %30 : vector<1x8xf32>
    %32 = arith.negf %31 : vector<1x8xf32>
    %33 = math.exp %32 : vector<1x8xf32>
    %cst_23 = arith.constant 1.000000e+00 : f32
    %34 = vector.broadcast %cst_23 : f32 to vector<1x8xf32>
    %35 = arith.addf %34, %33 : vector<1x8xf32>
    %36 = arith.divf %34, %35 : vector<1x8xf32>
    %c0_24 = arith.constant 0 : index
    %c0_25 = arith.constant 0 : index
    %37 = vector.load %arg10[%c0_24, %c0_25] : memref<1x8xf32, #tpu.memory_space<vmem>>, vector<1x8xf32>
    tpu.vector_store %arg10[%c0_24, %c0_25], %36 {strides = array<i32>} : memref<1x8xf32, #tpu.memory_space<vmem>>, vector<1x8xf32>,
    return
  }
  func.func @transform_0(%arg0: i32) -> (i32, i32) {
    %c0_i32 = arith.constant 0 : i32
    %c0_i32_0 = arith.constant 0 : i32
    return %arg0, %c0_i32 : i32, i32
  }
  func.func @transform_1(%arg0: i32) -> (i32, i32) {
    %c0_i32 = arith.constant 0 : i32
    %c0_i32_0 = arith.constant 0 : i32
    %c0_i32_1 = arith.constant 0 : i32
    return %c0_i32, %c0_i32_0 : i32, i32
  }
  func.func @transform_2(%arg0: i32) -> (i32, i32) {
    %c0_i32 = arith.constant 0 : i32
    %c0_i32_0 = arith.constant 0 : i32
    %c0_i32_1 = arith.constant 0 : i32
    return %c0_i32, %c0_i32_0 : i32, i32
  }
  func.func @transform_3(%arg0: i32) -> (i32, i32) {
    %c0_i32 = arith.constant 0 : i32
    %c0_i32_0 = arith.constant 0 : i32
    %c0_i32_1 = arith.constant 0 : i32
    return %c0_i32, %c0_i32_0 : i32, i32
  }
  func.func @transform_4(%arg0: i32) -> (i32, i32) {
    %c0_i32 = arith.constant 0 : i32
    %c0_i32_0 = arith.constant 0 : i32
    %c0_i32_1 = arith.constant 0 : i32
    return %c0_i32, %c0_i32_0 : i32, i32
  }
  func.func @transform_5(%arg0: i32) -> (i32, i32) {
    %c0_i32 = arith.constant 0 : i32
    %c0_i32_0 = arith.constant 0 : i32
    %c0_i32_1 = arith.constant 0 : i32
    return %c0_i32, %c0_i32_0 : i32, i32
  }
  func.func @transform_6(%arg0: i32) -> (i32, i32) {
    %c0_i32 = arith.constant 0 : i32
    %c0_i32_0 = arith.constant 0 : i32
    %c0_i32_1 = arith.constant 0 : i32
    return %c0_i32, %c0_i32_0 : i32, i32
  }
  func.func @transform_7(%arg0: i32) -> (i32, i32) {
    %c0_i32 = arith.constant 0 : i32
    %c0_i32_0 = arith.constant 0 : i32
    %c0_i32_1 = arith.constant 0 : i32
    return %c0_i32, %c0_i32_0 : i32, i32
  }
  func.func @transform_8(%arg0: i32) -> (i32, i32) {
    %c0_i32 = arith.constant 0 : i32
    %c0_i32_0 = arith.constant 0 : i32
    %c0_i32_1 = arith.constant 0 : i32
    return %c0_i32, %c0_i32_0 : i32, i32
  }
  func.func @transform_9(%arg0: i32) -> (i32, i32) {
    %c0_i32 = arith.constant 0 : i32
    %c0_i32_0 = arith.constant 0 : i32
    return %c0_i32, %arg0 : i32, i32
  }
}

</mosaic_0001>

<llo_original>
// kernel: tpu_custom_call.1
$region0: #{tpu_custom_call.1}
  #allocation0 [shape = 'u32[]', space=smem, size = 0x4, offset = 0x4, fixed_abs, tag = 'smem constant byte address 0x4 - core index']
  #allocation1 [shape = 'u32[72,128]{1,0:T(1,128)}', space=vmem, size = 0x9000, scoped, tag = 'internal scratch']
  #allocation2 [shape = 'f32[1,1]{1,0:T(1,128)S(6)}', space=smem, size = 0x200, scoped, tag = 'scoped memory for tpu_custom_call.1']
  %s0 = inlined_call_operand.hbm [shape: f32[8,16], index: 0, kind: input, shape index: {}]
  %s1 = inlined_call_operand.hbm [shape: bf16[16,128], index: 1, kind: input, shape index: {}]
  %s2 = inlined_call_operand.vmem [shape: f32[1,128], index: 2, kind: input, shape index: {}]
  %s3 = inlined_call_operand.hbm [shape: bf16[128,128], index: 3, kind: input, shape index: {}]
  %s4 = inlined_call_operand.vmem [shape: f32[1,128], index: 4, kind: input, shape index: {}]
  %s5 = inlined_call_operand.hbm [shape: bf16[128,128], index: 5, kind: input, shape index: {}]
  %s6 = inlined_call_operand.vmem [shape: f32[1,128], index: 6, kind: input, shape index: {}]
  %s7 = inlined_call_operand.vmem [shape: bf16[8,128], index: 7, kind: input, shape index: {}]
  %s8 = inlined_call_operand.<no memory space> [shape: f32[1,1], index: 8, kind: input, shape index: {}]
  %s9 = inlined_call_operand.hbm [shape: f32[1,8], index: 9, kind: output, shape index: {}]
  %s10 = sld [smem:[#allocation0]]
  $region62: #{tpu_custom_call.1} parent=0
    _
  %s12 = ssub.s32 1, %s10
  %s13 = scalar_select 0, %s12, %s10
  %14 = sst [smem:[#allocation2]] %s8
  $region1: #{tpu_custom_call.1} parent=0
    #allocation3 [shape = 'u8[4096]{0}', space=vmem, size = 0x1000, scoped, tag = 'input window, operand 0, single buffered']
    #allocation4 [shape = 's32[1]{0}', space=sflag, size = 0x4, scoped, tag = 'scoped memory for tpu_custom_call.1']
    #allocation5 [shape = 's32[1]{0}', space=sflag, size = 0x4, scoped, tag = 'scoped memory for tpu_custom_call.1']
    #allocation6 [shape = 'u8[4096]{0}', space=vmem, size = 0x1000, scoped, tag = 'input window, operand 1, single buffered']
    #allocation7 [shape = 's32[1]{0}', space=sflag, size = 0x4, scoped, tag = 'scoped memory for tpu_custom_call.1']
    #allocation8 [shape = 'u8[32768]{0}', space=vmem, size = 0x8000, scoped, tag = 'input window, operand 3, single buffered']
    #allocation9 [shape = 'u8[32768]{0}', space=vmem, size = 0x8000, scoped, tag = 'input window, operand 5, single buffered']
    #allocation10 [shape = 's32[1]{0}', space=sflag, size = 0x4, scoped, tag = 'scoped memory for tpu_custom_call.1']
    #allocation11 [shape = 'u8[512]{0}', space=vmem, size = 0x400, scoped, tag = 'output window, operand 0, single buffered']
    %15 = vsyncpa [#allocation4], 0
    %16 = vsyncpa [#allocation7], 0
    %17 = vsyncpa [#allocation10], 0
    %18 = vsyncpa [#allocation5], 0
    // Predicated region
    $region2: #{tpu_custom_call.1} parent=1 // pred_check
      _
    $region3: #{tpu_custom_call.1} parent=1 // pred_check_branch
      %20 = sbr.rel (0) target = $region5
    $region4: #{tpu_custom_call.1} parent=1 // pred_region
      %22 = vsyncadd [#allocation4], 0
      %s24 = sshll.u32 %s0, 4
      %s25 = int_to_ptr.hbm [resolvable:$true] %s24
      %s26 = sshll.u32 [#allocation3], 4
      %s27 = int_to_ptr.vmem [resolvable:$true] %s26
      %29 = dma.hbm_to_vmem [thread:$0]  %s25, 128, %s27, [#allocation4]
    $region5: #{tpu_custom_call.1} parent=1 // pred_fallthru
      _
    // Predicated region
    $region6: #{tpu_custom_call.1} parent=1 // pred_check
      _
    $region7: #{tpu_custom_call.1} parent=1 // pred_check_branch
      %31 = sbr.rel (0) target = $region9
    $region8: #{tpu_custom_call.1} parent=1 // pred_region
      %33 = vsyncadd [#allocation7], 0
      %s34 = sshll.u32 %s1, 4
      %s35 = int_to_ptr.hbm [resolvable:$true] %s34
      %s36 = sshll.u32 [#allocation6], 4
      %s37 = int_to_ptr.vmem [resolvable:$true] %s36
      %42 = dma.hbm_to_vmem [thread:$0]  %s35, 128, %s37, [#allocation7], 64, 64, 4
    $region9: #{tpu_custom_call.1} parent=1 // pred_fallthru
      _
    // Predicated region
    $region10: #{tpu_custom_call.1} parent=1 // pred_check
      _
    $region11: #{tpu_custom_call.1} parent=1 // pred_check_branch
      %44 = sbr.rel (0) target = $region13
    $region12: #{tpu_custom_call.1} parent=1 // pred_region
      _
    $region13: #{tpu_custom_call.1} parent=1 // pred_fallthru
      _
    // Predicated region
    $region14: #{tpu_custom_call.1} parent=1 // pred_check
      _
    $region15: #{tpu_custom_call.1} parent=1 // pred_check_branch
      %46 = sbr.rel (0) target = $region17
    $region16: #{tpu_custom_call.1} parent=1 // pred_region
      %48 = vsyncadd [#allocation7], 0
      %s49 = sshll.u32 %s3, 4
      %s50 = int_to_ptr.hbm [resolvable:$true] %s49
      %s51 = sshll.u32 [#allocation8], 4
      %s52 = int_to_ptr.vmem [resolvable:$true] %s51
      %57 = dma.hbm_to_vmem [thread:$0]  %s50, 1024, %s52, [#allocation7], 64, 64, 4
    $region17: #{tpu_custom_call.1} parent=1 // pred_fallthru
      _
    // Predicated region
    $region18: #{tpu_custom_call.1} parent=1 // pred_check
      _
    $region19: #{tpu_custom_call.1} parent=1 // pred_check_branch
      %59 = sbr.rel (0) target = $region21
    $region20: #{tpu_custom_call.1} parent=1 // pred_region
      _
    $region21: #{tpu_custom_call.1} parent=1 // pred_fallthru
      _
    // Predicated region
    $region22: #{tpu_custom_call.1} parent=1 // pred_check
      _
    $region23: #{tpu_custom_call.1} parent=1 // pred_check_branch
      %61 = sbr.rel (0) target = $region25
    $region24: #{tpu_custom_call.1} parent=1 // pred_region
      %63 = vsyncadd [#allocation10], 0
      %s64 = sshll.u32 %s5, 4
      %s65 = int_to_ptr.hbm [resolvable:$true] %s64
      %s66 = sshll.u32 [#allocation9], 4
      %s67 = int_to_ptr.vmem [resolvable:$true] %s66
      %72 = dma.hbm_to_vmem [thread:$0]  %s65, 1024, %s67, [#allocation10], 64, 64, 4
    $region25: #{tpu_custom_call.1} parent=1 // pred_fallthru
      _
    // Predicated region
    $region26: #{tpu_custom_call.1} parent=1 // pred_check
      _
    $region27: #{tpu_custom_call.1} parent=1 // pred_check_branch
      %74 = sbr.rel (0) target = $region29
    $region28: #{tpu_custom_call.1} parent=1 // pred_region
      _
    $region29: #{tpu_custom_call.1} parent=1 // pred_fallthru
      _
    // Predicated region
    $region30: #{tpu_custom_call.1} parent=1 // pred_check
      _
    $region31: #{tpu_custom_call.1} parent=1 // pred_check_branch
      %76 = sbr.rel (0) target = $region33
    $region32: #{tpu_custom_call.1} parent=1 // pred_region
      _
    $region33: #{tpu_custom_call.1} parent=1 // pred_fallthru
      _
    // Predicated region
    $region34: #{tpu_custom_call.1} parent=1 // pred_check
      _
    $region35: #{tpu_custom_call.1} parent=1 // pred_check_branch
      %78 = sbr.rel (0) target = $region37
    $region36: #{tpu_custom_call.1} parent=1 // pred_region
      _
    $region37: #{tpu_custom_call.1} parent=1 // pred_fallthru
      _
    // Predicated region
    $region38: #{tpu_custom_call.1} parent=1 // pred_check
      _
    $region39: #{tpu_custom_call.1} parent=1 // pred_check_branch
      %80 = sbr.rel (0) target = $region41
    $region40: #{tpu_custom_call.1} parent=1 // pred_region
      %82 = dma.done [#allocation4], 128
    $region41: #{tpu_custom_call.1} parent=1 // pred_fallthru
      _
    // Predicated region
    $region42: #{tpu_custom_call.1} parent=1 // pred_check
      _
    $region43: #{tpu_custom_call.1} parent=1 // pred_check_branch
      %84 = sbr.rel (0) target = $region45
    $region44: #{tpu_custom_call.1} parent=1 // pred_region
      %86 = dma.done [#allocation7], 128
    $region45: #{tpu_custom_call.1} parent=1 // pred_fallthru
      _
    // Predicated region
    $region46: #{tpu_custom_call.1} parent=1 // pred_check
      _
    $region47: #{tpu_custom_call.1} parent=1 // pred_check_branch
      %88 = sbr.rel (0) target = $region49
    $region48: #{tpu_custom_call.1} parent=1 // pred_region
      %90 = dma.done [#allocation7], 1024
    $region49: #{tpu_custom_call.1} parent=1 // pred_fallthru
      _
    // Predicated region
    $region50: #{tpu_custom_call.1} parent=1 // pred_check
      _
    $region51: #{tpu_custom_call.1} parent=1 // pred_check_branch
      %92 = sbr.rel (0) target = $region53
    $region52: #{tpu_custom_call.1} parent=1 // pred_region
      %94 = dma.done [#allocation10], 1024
    $region53: #{tpu_custom_call.1} parent=1 // pred_fallthru
      _
    %v96 = vld [vmem:[#allocation3] sm:$0xff]
    %v97 = vpack.c.bf16 %v96, %v96
    %v98 = vld [vmem:[#allocation6] sm:$0xf]
    %v99 = vld [vmem:[#allocation6 + $0x4] sm:$0xf]
    %v100 = vld [vmem:[%s2] sm:$0x1]
    %v102 = vperm.slane %v100, 0
    %v106 = vunpack.c.l.b16 %v98
    %v107 = vunpack.c.l.b16 %v99
    %v108 = vpack.c.b16 %v107, %v106
    %vm110 = vcmask 130048
    %v112 = vsel %vm110, %v97, 0
    %114 = vmatpush.bf16.msra.mxu0 0
    %115 = vmatpush.bf16.msra.mxu0 0
    %116 = vmatpush.bf16.msra.mxu0 0
    %117 = vmatpush.bf16.msra.mxu0 0
    %118 = vmatpush.bf16.msra.mxu0 0
    %119 = vmatpush.bf16.msra.mxu0 0
    %120 = vmatpush.bf16.msra.mxu0 0
    %121 = vmatpush.bf16.msra.mxu0 %v108
    %122 = vmatmul.bf16.gmra.mxu0 %v112
    %v123 = vpop.f32.mrf.mxu0
    %v124 = vadd.f32 %v102, %v123
    %v125 = vpop.f32.mrf.mxu0
    %126 = vdwg.mxu0
    %v127 = vmax.f32 %v124, 0.0
    %v128 = vpack.c.bf16 %v127, %v127
    %v129 = vld [vmem:[#allocation8] sm:$0xf]
    %v130 = vld [vmem:[#allocation8 + $0x4] sm:$0xf]
    %v131 = vld [vmem:[#allocation8 + $0x8] sm:$0xf]
    %v132 = vld [vmem:[#allocation8 + $0xc] sm:$0xf]
    %v133 = vld [vmem:[#allocation8 + $0x10] sm:$0xf]
    %v134 = vld [vmem:[#allocation8 + $0x14] sm:$0xf]
    %v135 = vld [vmem:[#allocation8 + $0x18] sm:$0xf]
    %v136 = vld [vmem:[#allocation8 + $0x1c] sm:$0xf]
    %v137 = vld [vmem:[#allocation8 + $0x20] sm:$0xf]
    %v138 = vld [vmem:[#allocation8 + $0x24] sm:$0xf]
    %v139 = vld [vmem:[#allocation8 + $0x28] sm:$0xf]
    %v140 = vld [vmem:[#allocation8 + $0x2c] sm:$0xf]
    %v141 = vld [vmem:[#allocation8 + $0x30] sm:$0xf]
    %v142 = vld [vmem:[#allocation8 + $0x34] sm:$0xf]
    %v143 = vld [vmem:[#allocation8 + $0x38] sm:$0xf]
    %v144 = vld [vmem:[#allocation8 + $0x3c] sm:$0xf]
    %v145 = vld [vmem:[%s4] sm:$0x1]
    %v147 = vperm.slane %v145, 0
    %v165 = vunpack.c.l.b16 %v129
    %v166 = vunpack.c.l.b16 %v130
    %v167 = vunpack.c.l.b16 %v131
    %v168 = vunpack.c.l.b16 %v132
    %v169 = vunpack.c.l.b16 %v133
    %v170 = vunpack.c.l.b16 %v134
    %v171 = vunpack.c.l.b16 %v135
    %v172 = vunpack.c.l.b16 %v136
    %v173 = vunpack.c.l.b16 %v137
    %v174 = vunpack.c.l.b16 %v138
    %v175 = vunpack.c.l.b16 %v139
    %v176 = vunpack.c.l.b16 %v140
    %v177 = vunpack.c.l.b16 %v141
    %v178 = vunpack.c.l.b16 %v142
    %v179 = vunpack.c.l.b16 %v143
    %v180 = vunpack.c.l.b16 %v144
    %v181 = vpack.c.b16 %v166, %v165
    %v182 = vpack.c.b16 %v168, %v167
    %v183 = vpack.c.b16 %v170, %v169
    %v184 = vpack.c.b16 %v172, %v171
    %v185 = vpack.c.b16 %v174, %v173
    %v186 = vpack.c.b16 %v176, %v175
    %v187 = vpack.c.b16 %v178, %v177
    %v188 = vpack.c.b16 %v180, %v179
    %197 = vmatpush.bf16.msra.mxu0 %v188
    %198 = vmatpush.bf16.msra.mxu0 %v187
    %199 = vmatpush.bf16.msra.mxu0 %v186
    %200 = vmatpush.bf16.msra.mxu0 %v185
    %201 = vmatpush.bf16.msra.mxu0 %v184
    %202 = vmatpush.bf16.msra.mxu0 %v183
    %203 = vmatpush.bf16.msra.mxu0 %v182
    %204 = vmatpush.bf16.msra.mxu0 %v181
    %205 = vmatmul.bf16.gmra.mxu0 %v128
    %v206 = vpop.f32.mrf.mxu0
    %v207 = vadd.f32 %v147, %v206
    %v208 = vpop.f32.mrf.mxu0
    %209 = vdwg.mxu0
    %v210 = vmax.f32 %v207, 0.0
    %v211 = vpack.c.bf16 %v210, %v210
    %v212 = vld [vmem:[#allocation9] sm:$0xf]
    %v213 = vld [vmem:[#allocation9 + $0x4] sm:$0xf]
    %v214 = vld [vmem:[#allocation9 + $0x8] sm:$0xf]
    %v215 = vld [vmem:[#allocation9 + $0xc] sm:$0xf]
    %v216 = vld [vmem:[#allocation9 + $0x10] sm:$0xf]
    %v217 = vld [vmem:[#allocation9 + $0x14] sm:$0xf]
    %v218 = vld [vmem:[#allocation9 + $0x18] sm:$0xf]
    %v219 = vld [vmem:[#allocation9 + $0x1c] sm:$0xf]
    %v220 = vld [vmem:[#allocation9 + $0x20] sm:$0xf]
    %v221 = vld [vmem:[#allocation9 + $0x24] sm:$0xf]
    %v222 = vld [vmem:[#allocation9 + $0x28] sm:$0xf]
    %v223 = vld [vmem:[#allocation9 + $0x2c] sm:$0xf]
    %v224 = vld [vmem:[#allocation9 + $0x30] sm:$0xf]
    %v225 = vld [vmem:[#allocation9 + $0x34] sm:$0xf]
    %v226 = vld [vmem:[#allocation9 + $0x38] sm:$0xf]
    %v227 = vld [vmem:[#allocation9 + $0x3c] sm:$0xf]
    %v228 = vld [vmem:[%s6] sm:$0x1]
    %v230 = vperm.slane %v228, 0
    %v248 = vunpack.c.l.b16 %v212
    %v249 = vunpack.c.l.b16 %v213
    %v250 = vunpack.c.l.b16 %v214
    %v251 = vunpack.c.l.b16 %v215
    %v252 = vunpack.c.l.b16 %v216
    %v253 = vunpack.c.l.b16 %v217
    %v254 = vunpack.c.l.b16 %v218
    %v255 = vunpack.c.l.b16 %v219
    %v256 = vunpack.c.l.b16 %v220
    %v257 = vunpack.c.l.b16 %v221
    %v258 = vunpack.c.l.b16 %v222
    %v259 = vunpack.c.l.b16 %v223
    %v260 = vunpack.c.l.b16 %v224
    %v261 = vunpack.c.l.b16 %v225
    %v262 = vunpack.c.l.b16 %v226
    %v263 = vunpack.c.l.b16 %v227
    %v264 = vpack.c.b16 %v249, %v248
    %v265 = vpack.c.b16 %v251, %v250
    %v266 = vpack.c.b16 %v253, %v252
    %v267 = vpack.c.b16 %v255, %v254
    %v268 = vpack.c.b16 %v257, %v256
    %v269 = vpack.c.b16 %v259, %v258
    %v270 = vpack.c.b16 %v261, %v260
    %v271 = vpack.c.b16 %v263, %v262
    %280 = vmatpush.bf16.msra.mxu0 %v271
    %281 = vmatpush.bf16.msra.mxu0 %v270
    %282 = vmatpush.bf16.msra.mxu0 %v269
    %283 = vmatpush.bf16.msra.mxu0 %v268
    %284 = vmatpush.bf16.msra.mxu0 %v267
    %285 = vmatpush.bf16.msra.mxu0 %v266
    %286 = vmatpush.bf16.msra.mxu0 %v265
    %287 = vmatpush.bf16.msra.mxu0 %v264
    %288 = vmatmul.bf16.gmra.mxu0 %v211
    %v289 = vpop.f32.mrf.mxu0
    %v290 = vadd.f32 %v230, %v289
    %v291 = vpop.f32.mrf.mxu0
    %292 = vdwg.mxu0
    %v293 = vmax.f32 %v290, 0.0
    %v294 = vpack.c.bf16 %v293, %v293
    %v295 = vld [vmem:[%s7] sm:$0xf]
    %296 = vmatpush.bf16.xpose.msra.mxu0 0
    %297 = vmatpush.bf16.xpose.msra.mxu0 0
    %298 = vmatpush.bf16.xpose.msra.mxu0 0
    %299 = vmatpush.bf16.xpose.msra.mxu0 0
    %300 = vmatpush.bf16.xpose.msra.mxu0 0
    %301 = vmatpush.bf16.xpose.msra.mxu0 0
    %302 = vmatpush.bf16.xpose.msra.mxu0 0
    %303 = vmatpush.bf16.xpose.msra.mxu0 %v294
    %304 = vmatmul.bf16.gmra.mxu0 %v295
    %v305 = vpop.f32.mrf.mxu0
    %v306 = vadd.f32 0.0, %v305
    %v307 = vpop.f32.mrf.mxu0
    %308 = vdwg.mxu0
    %s309 = sld [smem:[#allocation2]]
    %v310 = vstv %s309
    %v311 = vadd.f32 %v306, %v310
    %v312 = vxor.u32 %v311, 2147483648
    %v313 = vmul.f32 %v312, 1.442695
    %v314 = vpow.pop %v313
    %v315 = vadd.f32 %v314, 1.0
    %v316 = vrcp.pop %v315
    %v317 = vmul.f32 %v315, %v316
    %v318 = vsub.f32 1.0, %v317
    %v319 = vmul.f32 %v316, %v318
    %v320 = vadd.f32 %v316, %v319
    %vm321 = vweird.f32 %v315
    %vm322 = vweird.f32 %v316
    %vm323 = vmor %vm321, %vm322
    %v324 = vsel %vm323, %v316, %v320
    %v325 = vand.u32 2147483647, %v315
    %vm326 = vcmp.eq.f32.partialorder %v325, 8.507059e+37
    %v327 = vand.u32 %v315, 2147483648
    %v328 = vor.u32 1.1754944e-38, %v327
    %v329 = vsel %vm326, %v328, %v324
    %v330 = vmul.f32 1.0, %v329
    %vm331 = vcmask 57344
    %332 = vst.msk [vmem:[#allocation11] sm:$0x1] %vm331, %v330
    // Predicated region
    $region54: #{tpu_custom_call.1} parent=1 // pred_check
      _
    $region55: #{tpu_custom_call.1} parent=1 // pred_check_branch
      %334 = sbr.rel (0) target = $region57
    $region56: #{tpu_custom_call.1} parent=1 // pred_region
      %336 = vsyncadd [#allocation5], 0
      %s338 = sshll.u32 [#allocation11], 4
      %s339 = int_to_ptr.vmem [resolvable:$true] %s338
      %s340 = sshll.u32 %s9, 4
      %s341 = int_to_ptr.hbm [resolvable:$true] %s340
      %343 = dma.vmem_to_hbm [thread:$0]  %s339, 16, %s341, [#allocation5]
    $region57: #{tpu_custom_call.1} parent=1 // pred_fallthru
      _
    // Predicated region
    $region58: #{tpu_custom_call.1} parent=1 // pred_check
      _
    $region59: #{tpu_custom_call.1} parent=1 // pred_check_branch
      %345 = sbr.rel (0) target = $region61
    $region60: #{tpu_custom_call.1} parent=1 // pred_region
      %347 = dma.done [#allocation5], 16
    $region61: #{tpu_custom_call.1} parent=1 // pred_fallthru
      _
    %348 = vsyncpa [#allocation4], 1
    %349 = vsyncpa [#allocation7], 1
    %350 = vsyncpa [#allocation10], 1
    %351 = vsyncpa [#allocation5], 1

</llo_original>
